<compile_context>
chip_gen: v7x
topology: tpu7x:2x2x1
jax: 0.10.0
libtpu: 0.0.40
codegen_flags: <defaults>
</compile_context>

<pallas_src>
import functools

import jax
import jax.numpy as jnp
from jax.experimental import pallas as pl
from jax.experimental.pallas import tpu as pltpu

EPS = 1e-5  # BatchNorm eps


def _round_up(n, m):
    return ((n + m - 1) // m) * m


# ----------------------------------------------------------------------------
# Fused ConvBlock kernel (one strip of one image per grid step)
# ----------------------------------------------------------------------------
def _conv_block_kernel(x_ref, w1_ref, b1_ref, w2_ref, b2_ref, o_ref,
                       col1_ref, h_ref, col2_ref, *, H, W, Wp, Hs):
    """Channel-major fused double conv.

    x_ref  : (Cin, Sx)      bf16, zero-padded input strip (2-row halo each side),
                            flattened padded spatial on lanes, Sx = (Hs+5)*Wp
    w*_ref : (Cout, 9*Cin)  bf16, per-output-channel weights, BN scale folded,
                            K ordered (dy, dx, cin) to match the im2col below
    b*_ref : (Cout, 1)      f32 folded bias/BN shift
    o_ref  : (C2, L2)       f32 output strip, L2 = Hs*Wp (lane-dense store)
    col1/2 : VMEM bf16 im2col buffers, h_ref: VMEM bf16 padded intermediate
    """
    Cin = x_ref.shape[0]
    C1 = h_ref.shape[0]
    Sh = h_ref.shape[1]
    L1 = (Hs + 2) * Wp          # conv1 rows: output strip + 1-row halo each side
    L2 = Hs * Wp                # final output rows for this strip

    # ---- conv1: build im2col (K = 9*Cin) and do ONE MXU contraction ---------
    for dy in range(3):
        for dx in range(3):
            tap = dy * 3 + dx
            col1_ref[pl.ds(tap * Cin, Cin), :] = x_ref[:, pl.ds(dy * Wp + dx, L1)]
    acc1 = jnp.dot(w1_ref[...], col1_ref[...],
                   preferred_element_type=jnp.float32)          # (C1, L1) f32
    h = jnp.maximum(acc1 + b1_ref[...], 0.0)                    # f32 epilogue

    # ---- in-kernel validity mask (padded columns / rows outside the image) --
    lane = jax.lax.broadcasted_iota(jnp.int32, (1, L1), 1).astype(jnp.float32)
    row = jnp.floor((lane + 0.5) * (1.0 / Wp))                  # local row j
    col = lane - row * Wp                                       # column x
    y_h = row + (pl.program_id(1) * Hs - 1).astype(jnp.float32)  # global h row
    valid = (col < W) & (y_h >= 0.0) & (y_h < H)
    h = jnp.where(valid, h, 0.0)

    # ---- store padded intermediate; zero ONLY the border lanes --------------
    h_ref[:, pl.ds(1, L1)] = h.astype(h_ref.dtype)
    h_ref[:, pl.ds(0, 1)] = jnp.zeros((C1, 1), h_ref.dtype)
    h_ref[:, pl.ds(L1 + 1, Sh - L1 - 1)] = jnp.zeros((C1, Sh - L1 - 1), h_ref.dtype)

    # ---- conv2: im2col over the VMEM-resident intermediate + one dot --------
    for dy in range(3):
        for dx in range(3):
            tap = dy * 3 + dx
            col2_ref[pl.ds(tap * C1, C1), :] = h_ref[:, pl.ds(dy * Wp + dx, L2)]
    acc2 = jnp.dot(w2_ref[...], col2_ref[...],
                   preferred_element_type=jnp.float32)          # (C2, L2) f32
    o_ref[...] = jnp.maximum(acc2 + b2_ref[...], 0.0).astype(o_ref.dtype)


# ----------------------------------------------------------------------------
# Wrapper
# ----------------------------------------------------------------------------
def conv_block_apply(params, x, *, strip_rows=None):
    """ConvBlock forward. x: (B, Cin, H, W) f32 NCHW -> (B, C2, H, W) f32."""
    B, Cin, H, W = x.shape
    C1 = params["w1"].shape[0]
    C2 = params["w2"].shape[0]

    # Strip height: divisor of H so there are >= 2 strips when possible.
    # Production sizes: tune per generation so strip buffers fit VMEM (v7x has
    # only 64 MiB physical / 32 MiB scoped default).
    if strip_rows is None:
        strip_rows = next(
            (c for c in (128, 64, 32, 16, 8) if H % c == 0 and H // c >= 2), H)
    Hs = strip_rows
    assert H % Hs == 0
    n_strips = H // Hs

    Wp = _round_up(W + 2, 8)     # 1 left pad + W + right pads (sublane-aligned)
    Rx = Hs + 5                  # 2-row halo above/below + 1 slack row
    Sx = Rx * Wp
    L1 = (Hs + 2) * Wp
    L2 = Hs * Wp

    # Zero-pad (2 top / 3 bottom rows, 1 left / Wp-W-1 right cols), cast to bf16,
    # and materialize overlapping row strips so BlockSpecs stay non-overlapping.
    xp = jnp.pad(x, ((0, 0), (0, 0), (2, 3), (1, Wp - W - 1))).astype(jnp.bfloat16)
    strips = jnp.stack([xp[:, :, s * Hs:s * Hs + Rx, :] for s in range(n_strips)],
                       axis=1)
    strips = strips.reshape(B, n_strips, Cin, Sx)

    flops = 2 * B * n_strips * (L1 * 9 * Cin * C1 + L2 * 9 * C1 * C2)
    bytes_accessed = ((B * n_strips * Cin * Sx) * 2
                      + (B * n_strips * C2 * L2) * 4
                      + (params["w1"].size + params["w2"].size) * 2
                      + (params["b1"].size + params["b2"].size) * 4)

    kernel = functools.partial(_conv_block_kernel, H=H, W=W, Wp=Wp, Hs=Hs)
    out_strips = pl.pallas_call(
        kernel,
        out_shape=jax.ShapeDtypeStruct((B, n_strips, C2, L2), jnp.float32),
        grid=(B, n_strips),
        in_specs=[
            pl.BlockSpec((None, None, Cin, Sx), lambda b, s: (b, s, 0, 0)),  # strip
            pl.BlockSpec((C1, 9 * Cin), lambda b, s: (0, 0)),                # w1
            pl.BlockSpec((C1, 1), lambda b, s: (0, 0)),                      # b1
            pl.BlockSpec((C2, 9 * C1), lambda b, s: (0, 0)),                 # w2
            pl.BlockSpec((C2, 1), lambda b, s: (0, 0)),                      # b2
        ],
        out_specs=pl.BlockSpec((None, None, C2, L2), lambda b, s: (b, s, 0, 0)),
        scratch_shapes=[
            pltpu.VMEM((9 * Cin, L1), jnp.bfloat16),        # im2col for conv1
            pltpu.VMEM((C1, (Hs + 3) * Wp), jnp.bfloat16),  # padded intermediate
            pltpu.VMEM((9 * C1, L2), jnp.bfloat16),         # im2col for conv2
        ],
        compiler_params=pltpu.CompilerParams(
            dimension_semantics=("parallel", "parallel"),
            vmem_limit_bytes=32 * 1024 * 1024),
        cost_estimate=pl.CostEstimate(flops=flops, transcendentals=0,
                                      bytes_accessed=bytes_accessed),
    )(strips, params["w1"], params["b1"], params["w2"], params["b2"])

    # (B, n_strips, C2, Hs*Wp) -> NCHW; drop the padded columns.
    out = out_strips.reshape(B, n_strips, C2, Hs, Wp)
    out = jnp.transpose(out, (0, 2, 1, 3, 4)).reshape(B, C2, H, Wp)
    return out[:, :, :, :W]


# ----------------------------------------------------------------------------
# Deterministic parameters (eval-mode BN folded; weights stored bf16, K=9*Cin)
# ----------------------------------------------------------------------------
def init_conv_block_params(key, cin, cout):
    keys = jax.random.split(key, 6)

    def conv_bn(kw, kb, kg, ci, co):
        w = 0.1 * jax.random.normal(kw, (co, ci, 3, 3), jnp.float32)   # OIHW
        b = 0.1 * jax.random.normal(kb, (co,), jnp.float32)
        gamma = 1.0 + 0.1 * jax.random.normal(kg, (co,), jnp.float32)
        beta = jnp.zeros((co,), jnp.float32)
        # Eval-mode BN (running_mean=0, running_var=1) folded into the conv.
        scale = gamma / jnp.sqrt(1.0 + EPS)
        shift = b * scale + beta
        # (co, 9*ci) with K ordered (dy, dx, cin) to match the in-kernel im2col.
        wt = jnp.transpose(w, (0, 2, 3, 1)).reshape(co, 9 * ci) * scale[:, None]
        return wt.astype(jnp.bfloat16), shift.reshape(co, 1)

    w1, b1 = conv_bn(keys[0], keys[1], keys[2], cin, cout)
    w2, b2 = conv_bn(keys[3], keys[4], keys[5], cout, cout)
    return {"w1": w1, "b1": b1, "w2": w2, "b2": b2}


# ----------------------------------------------------------------------------
# Reference with identical bf16 quantization of operands (f32 accumulation)
# ----------------------------------------------------------------------------
def conv_block_reference(params, x):
    def conv(xi, wt, shift):
        co = wt.shape[0]
        ci = wt.shape[1] // 9
        w = jnp.transpose(wt.reshape(co, 3, 3, ci), (0, 3, 1, 2))   # OIHW bf16
        y = jax.lax.conv_general_dilated(
            xi, w, window_strides=(1, 1), padding=((1, 1), (1, 1)),
            dimension_numbers=("NCHW", "OIHW", "NCHW"),
            preferred_element_type=jnp.float32)
        return jnp.maximum(y + shift.reshape(1, co, 1, 1), 0.0)

    h = conv(x.astype(jnp.bfloat16), params["w1"], params["b1"])
    return conv(h.astype(jnp.bfloat16), params["w2"], params["b2"])


if __name__ == "__main__":
    key = jax.random.PRNGKey(0)
    kp, kx = jax.random.split(key)

    in_channels, out_channels = 4, 8
    B, H, W = 2, 16, 16

    params = init_conv_block_params(kp, in_channels, out_channels)
    x = jax.random.normal(kx, (B, in_channels, H, W), dtype=jnp.float32)

    fwd = jax.jit(conv_block_apply)
    out = jax.block_until_ready(fwd(params, x))
    assert out.shape == (B, out_channels, H, W), out.shape
    assert bool(jnp.all(jnp.isfinite(out)))

    ref = conv_block_reference(params, x)
    assert bool(jnp.allclose(out, ref, atol=5e-3, rtol=2e-2)), (
        float(jnp.max(jnp.abs(out - ref))))

    print("KERNEL_OK")
</pallas_src>

<mosaic_0001>
module attributes {stable_mosaic.version = 11 : i64} {
  func.func @_conv_block_kernel(%arg0: i32, %arg1: i32, %arg2: memref<1x1x4x312xbf16, #tpu.memory_space<vmem>>, %arg3: memref<8x36xbf16, #tpu.memory_space<vmem>>, %arg4: memref<8x1xf32, #tpu.memory_space<vmem>>, %arg5: memref<8x72xbf16, #tpu.memory_space<vmem>>, %arg6: memref<8x1xf32, #tpu.memory_space<vmem>>, %arg7: memref<1x1x8x192xf32, #tpu.memory_space<vmem>>, %arg8: memref<36x240xbf16, #tpu.memory_space<vmem>>, %arg9: memref<8x264xbf16, #tpu.memory_space<vmem>>, %arg10: memref<72x192xbf16, #tpu.memory_space<vmem>>) attributes {dimension_semantics = [#tpu.dimension_semantics<parallel>, #tpu.dimension_semantics<parallel>], iteration_bounds = array<i64: 2, 2>, scalar_prefetch = 0 : i64, scratch_operands = 3 : i64, tpu.core_type = #tpu.core_type<tc>, window_params = [{transform_indices = @transform_0, window_bounds = array<i64: 1, 1, 4, 312>}, {pipeline_mode = #tpu.pipeline_mode<synchronous>, transform_indices = @transform_1, window_bounds = array<i64: 8, 36>}, {pipeline_mode = #tpu.pipeline_mode<synchronous>, transform_indices = @transform_2, window_bounds = array<i64: 8, 1>}, {pipeline_mode = #tpu.pipeline_mode<synchronous>, transform_indices = @transform_3, window_bounds = array<i64: 8, 72>}, {pipeline_mode = #tpu.pipeline_mode<synchronous>, transform_indices = @transform_4, window_bounds = array<i64: 8, 1>}, {transform_indices = @transform_5, window_bounds = array<i64: 1, 1, 8, 192>}]} {
    %c0 = arith.constant 0 : index
    %c0_0 = arith.constant 0 : index
    %c0_1 = arith.constant 0 : index
    %c0_2 = arith.constant 0 : index
    %0 = vector.load %arg2[%c0, %c0_0, %c0_1, %c0_2] : memref<1x1x4x312xbf16, #tpu.memory_space<vmem>>, vector<1x1x4x240xbf16>
    %1 = vector.shape_cast %0 : vector<1x1x4x240xbf16> to vector<4x240xbf16>
    %c0_3 = arith.constant 0 : index
    %c0_4 = arith.constant 0 : index
    %2 = vector.load %arg8[%c0_3, %c0_4] : memref<36x240xbf16, #tpu.memory_space<vmem>>, vector<4x240xbf16>
    tpu.vector_store %arg8[%c0_3, %c0_4], %1 {strides = array<i32>} : memref<36x240xbf16, #tpu.memory_space<vmem>>, vector<4x240xbf16>,
    %c0_5 = arith.constant 0 : index
    %c0_6 = arith.constant 0 : index
    %c0_7 = arith.constant 0 : index
    %c1 = arith.constant 1 : index
    %3 = vector.load %arg2[%c0_5, %c0_6, %c0_7, %c1] : memref<1x1x4x312xbf16, #tpu.memory_space<vmem>>, vector<1x1x4x240xbf16>
    %4 = vector.shape_cast %3 : vector<1x1x4x240xbf16> to vector<4x240xbf16>
    %c4 = arith.constant 4 : index
    %c0_8 = arith.constant 0 : index
    %5 = vector.load %arg8[%c4, %c0_8] : memref<36x240xbf16, #tpu.memory_space<vmem>>, vector<4x240xbf16>
    tpu.vector_store %arg8[%c4, %c0_8], %4 {strides = array<i32>} : memref<36x240xbf16, #tpu.memory_space<vmem>>, vector<4x240xbf16>,
    %c0_9 = arith.constant 0 : index
    %c0_10 = arith.constant 0 : index
    %c0_11 = arith.constant 0 : index
    %c2 = arith.constant 2 : index
    %6 = vector.load %arg2[%c0_9, %c0_10, %c0_11, %c2] : memref<1x1x4x312xbf16, #tpu.memory_space<vmem>>, vector<1x1x4x240xbf16>
    %7 = vector.shape_cast %6 : vector<1x1x4x240xbf16> to vector<4x240xbf16>
    %c8 = arith.constant 8 : index
    %c0_12 = arith.constant 0 : index
    %8 = vector.load %arg8[%c8, %c0_12] : memref<36x240xbf16, #tpu.memory_space<vmem>>, vector<4x240xbf16>
    tpu.vector_store %arg8[%c8, %c0_12], %7 {strides = array<i32>} : memref<36x240xbf16, #tpu.memory_space<vmem>>, vector<4x240xbf16>,
    %c0_13 = arith.constant 0 : index
    %c0_14 = arith.constant 0 : index
    %c0_15 = arith.constant 0 : index
    %c24 = arith.constant 24 : index
    %9 = vector.load %arg2[%c0_13, %c0_14, %c0_15, %c24] : memref<1x1x4x312xbf16, #tpu.memory_space<vmem>>, vector<1x1x4x240xbf16>
    %10 = vector.shape_cast %9 : vector<1x1x4x240xbf16> to vector<4x240xbf16>
    %c12 = arith.constant 12 : index
    %c0_16 = arith.constant 0 : index
    %11 = vector.load %arg8[%c12, %c0_16] : memref<36x240xbf16, #tpu.memory_space<vmem>>, vector<4x240xbf16>
    tpu.vector_store %arg8[%c12, %c0_16], %10 {strides = array<i32>} : memref<36x240xbf16, #tpu.memory_space<vmem>>, vector<4x240xbf16>,
    %c0_17 = arith.constant 0 : index
    %c0_18 = arith.constant 0 : index
    %c0_19 = arith.constant 0 : index
    %c25 = arith.constant 25 : index
    %12 = vector.load %arg2[%c0_17, %c0_18, %c0_19, %c25] : memref<1x1x4x312xbf16, #tpu.memory_space<vmem>>, vector<1x1x4x240xbf16>
    %13 = vector.shape_cast %12 : vector<1x1x4x240xbf16> to vector<4x240xbf16>
    %c16 = arith.constant 16 : index
    %c0_20 = arith.constant 0 : index
    %14 = vector.load %arg8[%c16, %c0_20] : memref<36x240xbf16, #tpu.memory_space<vmem>>, vector<4x240xbf16>
    tpu.vector_store %arg8[%c16, %c0_20], %13 {strides = array<i32>} : memref<36x240xbf16, #tpu.memory_space<vmem>>, vector<4x240xbf16>,
    %c0_21 = arith.constant 0 : index
    %c0_22 = arith.constant 0 : index
    %c0_23 = arith.constant 0 : index
    %c26 = arith.constant 26 : index
    %15 = vector.load %arg2[%c0_21, %c0_22, %c0_23, %c26] : memref<1x1x4x312xbf16, #tpu.memory_space<vmem>>, vector<1x1x4x240xbf16>
    %16 = vector.shape_cast %15 : vector<1x1x4x240xbf16> to vector<4x240xbf16>
    %c20 = arith.constant 20 : index
    %c0_24 = arith.constant 0 : index
    %17 = vector.load %arg8[%c20, %c0_24] : memref<36x240xbf16, #tpu.memory_space<vmem>>, vector<4x240xbf16>
    tpu.vector_store %arg8[%c20, %c0_24], %16 {strides = array<i32>} : memref<36x240xbf16, #tpu.memory_space<vmem>>, vector<4x240xbf16>,
    %c0_25 = arith.constant 0 : index
    %c0_26 = arith.constant 0 : index
    %c0_27 = arith.constant 0 : index
    %c48 = arith.constant 48 : index
    %18 = vector.load %arg2[%c0_25, %c0_26, %c0_27, %c48] : memref<1x1x4x312xbf16, #tpu.memory_space<vmem>>, vector<1x1x4x240xbf16>
    %19 = vector.shape_cast %18 : vector<1x1x4x240xbf16> to vector<4x240xbf16>
    %c24_28 = arith.constant 24 : index
    %c0_29 = arith.constant 0 : index
    %20 = vector.load %arg8[%c24_28, %c0_29] : memref<36x240xbf16, #tpu.memory_space<vmem>>, vector<4x240xbf16>
    tpu.vector_store %arg8[%c24_28, %c0_29], %19 {strides = array<i32>} : memref<36x240xbf16, #tpu.memory_space<vmem>>, vector<4x240xbf16>,
    %c0_30 = arith.constant 0 : index
    %c0_31 = arith.constant 0 : index
    %c0_32 = arith.constant 0 : index
    %c49 = arith.constant 49 : index
    %21 = vector.load %arg2[%c0_30, %c0_31, %c0_32, %c49] : memref<1x1x4x312xbf16, #tpu.memory_space<vmem>>, vector<1x1x4x240xbf16>
    %22 = vector.shape_cast %21 : vector<1x1x4x240xbf16> to vector<4x240xbf16>
    %c28 = arith.constant 28 : index
    %c0_33 = arith.constant 0 : index
    %23 = vector.load %arg8[%c28, %c0_33] : memref<36x240xbf16, #tpu.memory_space<vmem>>, vector<4x240xbf16>
    tpu.vector_store %arg8[%c28, %c0_33], %22 {strides = array<i32>} : memref<36x240xbf16, #tpu.memory_space<vmem>>, vector<4x240xbf16>,
    %c0_34 = arith.constant 0 : index
    %c0_35 = arith.constant 0 : index
    %c0_36 = arith.constant 0 : index
    %c50 = arith.constant 50 : index
    %24 = vector.load %arg2[%c0_34, %c0_35, %c0_36, %c50] : memref<1x1x4x312xbf16, #tpu.memory_space<vmem>>, vector<1x1x4x240xbf16>
    %25 = vector.shape_cast %24 : vector<1x1x4x240xbf16> to vector<4x240xbf16>
    %c32 = arith.constant 32 : index
    %c0_37 = arith.constant 0 : index
    %26 = vector.load %arg8[%c32, %c0_37] : memref<36x240xbf16, #tpu.memory_space<vmem>>, vector<4x240xbf16>
    tpu.vector_store %arg8[%c32, %c0_37], %25 {strides = array<i32>} : memref<36x240xbf16, #tpu.memory_space<vmem>>, vector<4x240xbf16>,
    %c0_38 = arith.constant 0 : index
    %c0_39 = arith.constant 0 : index
    %27 = vector.load %arg3[%c0_38, %c0_39] : memref<8x36xbf16, #tpu.memory_space<vmem>>, vector<8x36xbf16>
    %c0_40 = arith.constant 0 : index
    %c0_41 = arith.constant 0 : index
    %28 = vector.load %arg8[%c0_40, %c0_41] : memref<36x240xbf16, #tpu.memory_space<vmem>>, vector<36x240xbf16>
    %cst = arith.constant dense<0.000000e+00> : vector<8x240xf32>
    %29 = tpu.matmul %27, %28, %cst {dimension_numbers = #tpu.dot_dimension_numbers<[1], [0], [0], [1], [0, 0, 1, 1], [], []>} : vector<8x36xbf16>, vector<36x240xbf16>, vector<8x240xf32> -> vector<8x240xf32>
    %c0_42 = arith.constant 0 : index
    %c0_43 = arith.constant 0 : index
    %30 = vector.load %arg4[%c0_42, %c0_43] : memref<8x1xf32, #tpu.memory_space<vmem>>, vector<8x1xf32>
    %31 = vector.broadcast %30 : vector<8x1xf32> to vector<8x240xf32>
    %32 = arith.addf %29, %31 : vector<8x240xf32>
    %cst_44 = arith.constant 0.000000e+00 : f32
    %33 = vector.broadcast %cst_44 : f32 to vector<8x240xf32>
    %34 = arith.maximumf %32, %33 : vector<8x240xf32>
    %35 = tpu.iota {dimensions = array<i32: 1>} : vector<1x240xi32>
    %36 = arith.sitofp %35 : vector<1x240xi32> to vector<1x240xf32>
    %cst_45 = arith.constant 5.000000e-01 : f32
    %37 = vector.broadcast %cst_45 : f32 to vector<1x240xf32>
    %38 = arith.addf %36, %37 : vector<1x240xf32>
    %cst_46 = arith.constant 0.0416666679 : f32
    %39 = vector.broadcast %cst_46 : f32 to vector<1x240xf32>
    %40 = arith.mulf %38, %39 : vector<1x240xf32>
    %41 = math.floor %40 : vector<1x240xf32>
    %cst_47 = arith.constant 2.400000e+01 : f32
    %42 = vector.broadcast %cst_47 : f32 to vector<1x240xf32>
    %43 = arith.mulf %41, %42 : vector<1x240xf32>
    %44 = arith.subf %36, %43 : vector<1x240xf32>
    %c8_i32 = arith.constant 8 : i32
    %45 = arith.muli %arg1, %c8_i32 : i32
    %c1_i32 = arith.constant 1 : i32
    %46 = arith.subi %45, %c1_i32 : i32
    %47 = arith.sitofp %46 : i32 to f32
    %48 = vector.broadcast %47 : f32 to vector<1x240xf32>
    %49 = arith.addf %41, %48 : vector<1x240xf32>
    %cst_48 = arith.constant 1.600000e+01 : f32
    %50 = vector.broadcast %cst_48 : f32 to vector<1x240xf32>
    %51 = arith.cmpf olt, %44, %50 : vector<1x240xf32>
    %cst_49 = arith.constant 0.000000e+00 : f32
    %52 = vector.broadcast %cst_49 : f32 to vector<1x240xf32>
    %53 = arith.cmpf oge, %49, %52 : vector<1x240xf32>
    %54 = arith.andi %51, %53 : vector<1x240xi1>
    %cst_50 = arith.constant 1.600000e+01 : f32
    %55 = vector.broadcast %cst_50 : f32 to vector<1x240xf32>
    %56 = arith.cmpf olt, %49, %55 : vector<1x240xf32>
    %57 = arith.andi %54, %56 : vector<1x240xi1>
    %cst_51 = arith.constant 0.000000e+00 : f32
    %58 = vector.shape_cast %57 : vector<1x240xi1> to vector<1x240xi1>
    %59 = vector.broadcast %58 : vector<1x240xi1> to vector<8x240xi1>
    %60 = vector.broadcast %cst_51 : f32 to vector<8x240xf32>
    %61 = arith.select %59, %34, %60 : vector<8x240xi1>, vector<8x240xf32>
    %62 = arith.truncf %61 : vector<8x240xf32> to vector<8x240xbf16>
    %c0_52 = arith.constant 0 : index
    %c1_53 = arith.constant 1 : index
    %63 = vector.load %arg9[%c0_52, %c1_53] : memref<8x264xbf16, #tpu.memory_space<vmem>>, vector<8x240xbf16>
    tpu.vector_store %arg9[%c0_52, %c1_53], %62 {strides = array<i32>} : memref<8x264xbf16, #tpu.memory_space<vmem>>, vector<8x240xbf16>,
    %cst_54 = arith.constant 0.000000e+00 : bf16
    %64 = vector.broadcast %cst_54 : bf16 to vector<8x1xbf16>
    %c0_55 = arith.constant 0 : index
    %c0_56 = arith.constant 0 : index
    %65 = vector.load %arg9[%c0_55, %c0_56] : memref<8x264xbf16, #tpu.memory_space<vmem>>, vector<8x1xbf16>
    tpu.vector_store %arg9[%c0_55, %c0_56], %64 {strides = array<i32>} : memref<8x264xbf16, #tpu.memory_space<vmem>>, vector<8x1xbf16>,
    %cst_57 = arith.constant 0.000000e+00 : bf16
    %66 = vector.broadcast %cst_57 : bf16 to vector<8x23xbf16>
    %c0_58 = arith.constant 0 : index
    %c241 = arith.constant 241 : index
    %67 = vector.load %arg9[%c0_58, %c241] : memref<8x264xbf16, #tpu.memory_space<vmem>>, vector<8x23xbf16>
    tpu.vector_store %arg9[%c0_58, %c241], %66 {strides = array<i32>} : memref<8x264xbf16, #tpu.memory_space<vmem>>, vector<8x23xbf16>,
    %c0_59 = arith.constant 0 : index
    %c0_60 = arith.constant 0 : index
    %68 = vector.load %arg9[%c0_59, %c0_60] : memref<8x264xbf16, #tpu.memory_space<vmem>>, vector<8x192xbf16>
    %c0_61 = arith.constant 0 : index
    %c0_62 = arith.constant 0 : index
    %69 = vector.load %arg10[%c0_61, %c0_62] : memref<72x192xbf16, #tpu.memory_space<vmem>>, vector<8x192xbf16>
    tpu.vector_store %arg10[%c0_61, %c0_62], %68 {strides = array<i32>} : memref<72x192xbf16, #tpu.memory_space<vmem>>, vector<8x192xbf16>,
    %c0_63 = arith.constant 0 : index
    %c1_64 = arith.constant 1 : index
    %70 = vector.load %arg9[%c0_63, %c1_64] : memref<8x264xbf16, #tpu.memory_space<vmem>>, vector<8x192xbf16>
    %c8_65 = arith.constant 8 : index
    %c0_66 = arith.constant 0 : index
    %71 = vector.load %arg10[%c8_65, %c0_66] : memref<72x192xbf16, #tpu.memory_space<vmem>>, vector<8x192xbf16>
    tpu.vector_store %arg10[%c8_65, %c0_66], %70 {strides = array<i32>} : memref<72x192xbf16, #tpu.memory_space<vmem>>, vector<8x192xbf16>,
    %c0_67 = arith.constant 0 : index
    %c2_68 = arith.constant 2 : index
    %72 = vector.load %arg9[%c0_67, %c2_68] : memref<8x264xbf16, #tpu.memory_space<vmem>>, vector<8x192xbf16>
    %c16_69 = arith.constant 16 : index
    %c0_70 = arith.constant 0 : index
    %73 = vector.load %arg10[%c16_69, %c0_70] : memref<72x192xbf16, #tpu.memory_space<vmem>>, vector<8x192xbf16>
    tpu.vector_store %arg10[%c16_69, %c0_70], %72 {strides = array<i32>} : memref<72x192xbf16, #tpu.memory_space<vmem>>, vector<8x192xbf16>,
    %c0_71 = arith.constant 0 : index
    %c24_72 = arith.constant 24 : index
    %74 = vector.load %arg9[%c0_71, %c24_72] : memref<8x264xbf16, #tpu.memory_space<vmem>>, vector<8x192xbf16>
    %c24_73 = arith.constant 24 : index
    %c0_74 = arith.constant 0 : index
    %75 = vector.load %arg10[%c24_73, %c0_74] : memref<72x192xbf16, #tpu.memory_space<vmem>>, vector<8x192xbf16>
    tpu.vector_store %arg10[%c24_73, %c0_74], %74 {strides = array<i32>} : memref<72x192xbf16, #tpu.memory_space<vmem>>, vector<8x192xbf16>,
    %c0_75 = arith.constant 0 : index
    %c25_76 = arith.constant 25 : index
    %76 = vector.load %arg9[%c0_75, %c25_76] : memref<8x264xbf16, #tpu.memory_space<vmem>>, vector<8x192xbf16>
    %c32_77 = arith.constant 32 : index
    %c0_78 = arith.constant 0 : index
    %77 = vector.load %arg10[%c32_77, %c0_78] : memref<72x192xbf16, #tpu.memory_space<vmem>>, vector<8x192xbf16>
    tpu.vector_store %arg10[%c32_77, %c0_78], %76 {strides = array<i32>} : memref<72x192xbf16, #tpu.memory_space<vmem>>, vector<8x192xbf16>,
    %c0_79 = arith.constant 0 : index
    %c26_80 = arith.constant 26 : index
    %78 = vector.load %arg9[%c0_79, %c26_80] : memref<8x264xbf16, #tpu.memory_space<vmem>>, vector<8x192xbf16>
    %c40 = arith.constant 40 : index
    %c0_81 = arith.constant 0 : index
    %79 = vector.load %arg10[%c40, %c0_81] : memref<72x192xbf16, #tpu.memory_space<vmem>>, vector<8x192xbf16>
    tpu.vector_store %arg10[%c40, %c0_81], %78 {strides = array<i32>} : memref<72x192xbf16, #tpu.memory_space<vmem>>, vector<8x192xbf16>,
    %c0_82 = arith.constant 0 : index
    %c48_83 = arith.constant 48 : index
    %80 = vector.load %arg9[%c0_82, %c48_83] : memref<8x264xbf16, #tpu.memory_space<vmem>>, vector<8x192xbf16>
    %c48_84 = arith.constant 48 : index
    %c0_85 = arith.constant 0 : index
    %81 = vector.load %arg10[%c48_84, %c0_85] : memref<72x192xbf16, #tpu.memory_space<vmem>>, vector<8x192xbf16>
    tpu.vector_store %arg10[%c48_84, %c0_85], %80 {strides = array<i32>} : memref<72x192xbf16, #tpu.memory_space<vmem>>, vector<8x192xbf16>,
    %c0_86 = arith.constant 0 : index
    %c49_87 = arith.constant 49 : index
    %82 = vector.load %arg9[%c0_86, %c49_87] : memref<8x264xbf16, #tpu.memory_space<vmem>>, vector<8x192xbf16>
    %c56 = arith.constant 56 : index
    %c0_88 = arith.constant 0 : index
    %83 = vector.load %arg10[%c56, %c0_88] : memref<72x192xbf16, #tpu.memory_space<vmem>>, vector<8x192xbf16>
    tpu.vector_store %arg10[%c56, %c0_88], %82 {strides = array<i32>} : memref<72x192xbf16, #tpu.memory_space<vmem>>, vector<8x192xbf16>,
    %c0_89 = arith.constant 0 : index
    %c50_90 = arith.constant 50 : index
    %84 = vector.load %arg9[%c0_89, %c50_90] : memref<8x264xbf16, #tpu.memory_space<vmem>>, vector<8x192xbf16>
    %c64 = arith.constant 64 : index
    %c0_91 = arith.constant 0 : index
    %85 = vector.load %arg10[%c64, %c0_91] : memref<72x192xbf16, #tpu.memory_space<vmem>>, vector<8x192xbf16>
    tpu.vector_store %arg10[%c64, %c0_91], %84 {strides = array<i32>} : memref<72x192xbf16, #tpu.memory_space<vmem>>, vector<8x192xbf16>,
    %c0_92 = arith.constant 0 : index
    %c0_93 = arith.constant 0 : index
    %86 = vector.load %arg5[%c0_92, %c0_93] : memref<8x72xbf16, #tpu.memory_space<vmem>>, vector<8x72xbf16>
    %c0_94 = arith.constant 0 : index
    %c0_95 = arith.constant 0 : index
    %87 = vector.load %arg10[%c0_94, %c0_95] : memref<72x192xbf16, #tpu.memory_space<vmem>>, vector<72x192xbf16>
    %cst_96 = arith.constant dense<0.000000e+00> : vector<8x192xf32>
    %88 = tpu.matmul %86, %87, %cst_96 {dimension_numbers = #tpu.dot_dimension_numbers<[1], [0], [0], [1], [0, 0, 1, 1], [], []>} : vector<8x72xbf16>, vector<72x192xbf16>, vector<8x192xf32> -> vector<8x192xf32>
    %c0_97 = arith.constant 0 : index
    %c0_98 = arith.constant 0 : index
    %89 = vector.load %arg6[%c0_97, %c0_98] : memref<8x1xf32, #tpu.memory_space<vmem>>, vector<8x1xf32>
    %90 = vector.broadcast %89 : vector<8x1xf32> to vector<8x192xf32>
    %91 = arith.addf %88, %90 : vector<8x192xf32>
    %cst_99 = arith.constant 0.000000e+00 : f32
    %92 = vector.broadcast %cst_99 : f32 to vector<8x192xf32>
    %93 = arith.maximumf %91, %92 : vector<8x192xf32>
    %c0_100 = arith.constant 0 : index
    %c0_101 = arith.constant 0 : index
    %c0_102 = arith.constant 0 : index
    %c0_103 = arith.constant 0 : index
    %94 = vector.load %arg7[%c0_100, %c0_101, %c0_102, %c0_103] : memref<1x1x8x192xf32, #tpu.memory_space<vmem>>, vector<1x1x8x192xf32>
    %95 = vector.shape_cast %94 : vector<1x1x8x192xf32> to vector<8x192xf32>
    %96 = vector.shape_cast %93 : vector<8x192xf32> to vector<1x1x8x192xf32>
    tpu.vector_store %arg7[%c0_100, %c0_101, %c0_102, %c0_103], %96 {strides = array<i32>} : memref<1x1x8x192xf32, #tpu.memory_space<vmem>>, vector<1x1x8x192xf32>,
    return
  }
  func.func @transform_0(%arg0: i32, %arg1: i32) -> (i32, i32, i32, i32) {
    %c0_i32 = arith.constant 0 : i32
    %c0_i32_0 = arith.constant 0 : i32
    %c0_i32_1 = arith.constant 0 : i32
    return %arg0, %arg1, %c0_i32, %c0_i32_0 : i32, i32, i32, i32
  }
  func.func @transform_1(%arg0: i32, %arg1: i32) -> (i32, i32) {
    %c0_i32 = arith.constant 0 : i32
    %c0_i32_0 = arith.constant 0 : i32
    %c0_i32_1 = arith.constant 0 : i32
    return %c0_i32, %c0_i32_0 : i32, i32
  }
  func.func @transform_2(%arg0: i32, %arg1: i32) -> (i32, i32) {
    %c0_i32 = arith.constant 0 : i32
    %c0_i32_0 = arith.constant 0 : i32
    %c0_i32_1 = arith.constant 0 : i32
    return %c0_i32, %c0_i32_0 : i32, i32
  }
  func.func @transform_3(%arg0: i32, %arg1: i32) -> (i32, i32) {
    %c0_i32 = arith.constant 0 : i32
    %c0_i32_0 = arith.constant 0 : i32
    %c0_i32_1 = arith.constant 0 : i32
    return %c0_i32, %c0_i32_0 : i32, i32
  }
  func.func @transform_4(%arg0: i32, %arg1: i32) -> (i32, i32) {
    %c0_i32 = arith.constant 0 : i32
    %c0_i32_0 = arith.constant 0 : i32
    %c0_i32_1 = arith.constant 0 : i32
    return %c0_i32, %c0_i32_0 : i32, i32
  }
  func.func @transform_5(%arg0: i32, %arg1: i32) -> (i32, i32, i32, i32) {
    %c0_i32 = arith.constant 0 : i32
    %c0_i32_0 = arith.constant 0 : i32
    %c0_i32_1 = arith.constant 0 : i32
    return %arg0, %arg1, %c0_i32, %c0_i32_0 : i32, i32, i32, i32
  }
}

</mosaic_0001>

<llo_original>
// kernel: conv_block_apply.1
$region0: #{conv_block_apply.1}
  #allocation0 [shape = 'u32[]', space=smem, size = 0x4, offset = 0x4, fixed_abs, tag = 'smem constant byte address 0x4 - core index']
  #allocation1 [shape = 'u32[144,128]{1,0:T(1,128)}', space=vmem, size = 0x12000, scoped, tag = 'internal scratch']
  #allocation2 [shape = 'bf16[36,240]{1,0:T(8,128)(2,1)}', space=vmem, size = 0x5000, scoped, tag = 'scratch operand']
  #allocation3 [shape = 'bf16[8,264]{1,0:T(8,128)(2,1)}', space=vmem, size = 0x1800, scoped, tag = 'scratch operand']
  #allocation4 [shape = 'bf16[72,192]{1,0:T(8,128)(2,1)}', space=vmem, size = 0x9000, scoped, tag = 'scratch operand']
  %s0 = inlined_call_operand.vmem [shape: bf16[2,2,4,312], index: 0, kind: input, shape index: {}]
  %s1 = inlined_call_operand.vmem [shape: bf16[8,36], index: 1, kind: input, shape index: {}]
  %s2 = inlined_call_operand.vmem [shape: f32[8,1], index: 2, kind: input, shape index: {}]
  %s3 = inlined_call_operand.vmem [shape: bf16[8,72], index: 3, kind: input, shape index: {}]
  %s4 = inlined_call_operand.vmem [shape: f32[8,1], index: 4, kind: input, shape index: {}]
  %s5 = inlined_call_operand.vmem [shape: f32[2,2,8,192], index: 5, kind: output, shape index: {}]
  %s6 = sld [smem:[#allocation0]]
  $region53: #{conv_block_apply.1} parent=0
    _
  %s8 = ssub.s32 1, %s6
  %s9 = scalar_select 0, %s8, %s6
  loop: start=0, step=1, limit=6
  $region2: #{conv_block_apply.1} parent=0 // loop_pre_header
    _
  $region3: #{conv_block_apply.1} parent=0 // loop_header
    %s11 = sphi 0, %s15
    %p12 = scmp.ge.s32.totalorder %s11, 6
    %s18 = sphi 0, %s30
    %s19 = sphi 0, %s26
    %s20 = sphi 0, %s18
    %s21 = sphi 0, %s19
    %s22 = sphi 0, %s20
    %s23 = sphi 0, %s21
    %s35 = sphi 0, %s37
    %s38 = sphi 0, %s35
    %s39 = sphi 0, %s38
    %s55 = sphi 0, %s39
    %s59 = sphi 0, %s59
    %s61 = sphi 0, %s59
    %s62 = sphi 0, %s61
    %s76 = sphi 0, %s62
    %s80 = sphi 0, %s80
    %s82 = sphi 0, %s80
    %s83 = sphi 0, %s82
    %s97 = sphi 0, %s83
    %s101 = sphi 0, %s101
    %s103 = sphi 0, %s101
    %s104 = sphi 0, %s103
    %s118 = sphi 0, %s104
    %s122 = sphi 0, %s122
    %s124 = sphi 0, %s122
    %s125 = sphi 0, %s124
    %s139 = sphi 0, %s125
    %s147 = sphi 0, %s149
    %s150 = sphi 0, %s147
    %s151 = sphi 0, %s150
    %s167 = sphi 0, %s151
  $region4: #{conv_block_apply.1} parent=0 // loop_header_branch
    %14 = sbr.rel (%p12) target = $region8
  $region5: #{conv_block_apply.1} parent=0 // loop_body
    %s16 = ssub.s32 %s11, 1
    %s17 = ssub.s32 %s11, 2
    %s24 = sadd.s32 1, %s19
    %p25 = scmp.ge.s32.totalorder %s24, 2
    %s26 = scalar_select %p25, 0, %s24
    %s27 = sadd.s32 1, %s18
    %s28 = scalar_select %p25, %s27, %s18
    %p29 = scmp.ge.s32.totalorder %s28, 2
    %s30 = scalar_select %p29, 0, %s28
    %s31 = ssub.s32 %s18, %s30
    %s32 = ssub.s32 %s19, %s26
    %s33 = sor.u32 %s31, %s32
    %p34 = scmp.eq.s32.totalorder %s33, 0
    %s36 = sadd.s32 %s35, 1
    %s37 = scalar_select %p34, %s35, %s36
    %p40 = pneg %p34
    %p41 = scmp.eq.s32.totalorder %s11, 3
    %p42 = por %p40, %p41
    %p43 = scmp.ne.s32.totalorder %s35, %s38
    %p44 = scmp.eq.s32.totalorder %s11, 0
    %p45 = por %p43, %p44
    %p46 = scmp.ne.s32.totalorder %s35, %s38
    %p47 = scmp.eq.s32.totalorder %s16, 3
    %p48 = por %p46, %p47
    %p49 = scmp.ne.s32.totalorder %s38, %s39
    %p50 = scmp.eq.s32.totalorder %s16, 0
    %p51 = por %p49, %p50
    %p52 = scmp.ne.s32.totalorder %s38, %s39
    %p53 = scmp.eq.s32.totalorder %s17, 3
    %p54 = por %p52, %p53
    %p56 = scmp.ne.s32.totalorder %s39, %s55
    %p57 = scmp.eq.s32.totalorder %s17, 0
    %p58 = por %p56, %p57
    %s60 = sadd.s32 %s59, 1
    %p63 = scmp.eq.s32.totalorder %s11, 3
    %p64 = scmp.ne.s32.totalorder %s59, %s61
    %p65 = scmp.eq.s32.totalorder %s11, 0
    %p66 = por %p64, %p65
    %p67 = scmp.ne.s32.totalorder %s59, %s61
    %p68 = scmp.eq.s32.totalorder %s16, 3
    %p69 = por %p67, %p68
    %p70 = scmp.ne.s32.totalorder %s61, %s62
    %p71 = scmp.eq.s32.totalorder %s16, 0
    %p72 = por %p70, %p71
    %p73 = scmp.ne.s32.totalorder %s61, %s62
    %p74 = scmp.eq.s32.totalorder %s17, 3
    %p75 = por %p73, %p74
    %p77 = scmp.ne.s32.totalorder %s62, %s76
    %p78 = scmp.eq.s32.totalorder %s17, 0
    %p79 = por %p77, %p78
    %s81 = sadd.s32 %s80, 1
    %p84 = scmp.eq.s32.totalorder %s11, 3
    %p85 = scmp.ne.s32.totalorder %s80, %s82
    %p86 = scmp.eq.s32.totalorder %s11, 0
    %p87 = por %p85, %p86
    %p88 = scmp.ne.s32.totalorder %s80, %s82
    %p89 = scmp.eq.s32.totalorder %s16, 3
    %p90 = por %p88, %p89
    %p91 = scmp.ne.s32.totalorder %s82, %s83
    %p92 = scmp.eq.s32.totalorder %s16, 0
    %p93 = por %p91, %p92
    %p94 = scmp.ne.s32.totalorder %s82, %s83
    %p95 = scmp.eq.s32.totalorder %s17, 3
    %p96 = por %p94, %p95
    %p98 = scmp.ne.s32.totalorder %s83, %s97
    %p99 = scmp.eq.s32.totalorder %s17, 0
    %p100 = por %p98, %p99
    %s102 = sadd.s32 %s101, 1
    %p105 = scmp.eq.s32.totalorder %s11, 3
    %p106 = scmp.ne.s32.totalorder %s101, %s103
    %p107 = scmp.eq.s32.totalorder %s11, 0
    %p108 = por %p106, %p107
    %p109 = scmp.ne.s32.totalorder %s101, %s103
    %p110 = scmp.eq.s32.totalorder %s16, 3
    %p111 = por %p109, %p110
    %p112 = scmp.ne.s32.totalorder %s103, %s104
    %p113 = scmp.eq.s32.totalorder %s16, 0
    %p114 = por %p112, %p113
    %p115 = scmp.ne.s32.totalorder %s103, %s104
    %p116 = scmp.eq.s32.totalorder %s17, 3
    %p117 = por %p115, %p116
    %p119 = scmp.ne.s32.totalorder %s104, %s118
    %p120 = scmp.eq.s32.totalorder %s17, 0
    %p121 = por %p119, %p120
    %s123 = sadd.s32 %s122, 1
    %p126 = scmp.eq.s32.totalorder %s11, 3
    %p127 = scmp.ne.s32.totalorder %s122, %s124
    %p128 = scmp.eq.s32.totalorder %s11, 0
    %p129 = por %p127, %p128
    %p130 = scmp.ne.s32.totalorder %s122, %s124
    %p131 = scmp.eq.s32.totalorder %s16, 3
    %p132 = por %p130, %p131
    %p133 = scmp.ne.s32.totalorder %s124, %s125
    %p134 = scmp.eq.s32.totalorder %s16, 0
    %p135 = por %p133, %p134
    %p136 = scmp.ne.s32.totalorder %s124, %s125
    %p137 = scmp.eq.s32.totalorder %s17, 3
    %p138 = por %p136, %p137
    %p140 = scmp.ne.s32.totalorder %s125, %s139
    %p141 = scmp.eq.s32.totalorder %s17, 0
    %p142 = por %p140, %p141
    %s143 = ssub.s32 %s18, %s30
    %s144 = ssub.s32 %s19, %s26
    %s145 = sor.u32 %s143, %s144
    %p146 = scmp.eq.s32.totalorder %s145, 0
    %s148 = sadd.s32 %s147, 1
    %s149 = scalar_select %p146, %s147, %s148
    %p152 = pneg %p146
    %p153 = scmp.eq.s32.totalorder %s11, 3
    %p154 = por %p152, %p153
    %p155 = scmp.ne.s32.totalorder %s147, %s150
    %p156 = scmp.eq.s32.totalorder %s11, 0
    %p157 = por %p155, %p156
    %p158 = scmp.ne.s32.totalorder %s147, %s150
    %p159 = scmp.eq.s32.totalorder %s16, 3
    %p160 = por %p158, %p159
    %p161 = scmp.ne.s32.totalorder %s150, %s151
    %p162 = scmp.eq.s32.totalorder %s16, 0
    %p163 = por %p161, %p162
    %p164 = scmp.ne.s32.totalorder %s150, %s151
    %p165 = scmp.eq.s32.totalorder %s17, 3
    %p166 = por %p164, %p165
    %p168 = scmp.ne.s32.totalorder %s151, %s167
    %p169 = scmp.eq.s32.totalorder %s17, 0
    %p170 = por %p168, %p169
    %p171 = scmp.le.s32.totalorder 1, %s11
    %p172 = scmp.lt.s32.totalorder %s11, 5
    %p173 = pnand %p171, %p172
    %p174 = pneg %p173
    // Predicated region
    $region9: #{conv_block_apply.1} parent=5 // pred_check
      _
    $region10: #{conv_block_apply.1} parent=5 // pred_check_branch
      %176 = sbr.rel (%p173) target = $region12
    $region11: #{conv_block_apply.1} parent=5 // pred_region
      %s177 = ssub.s32 %s11, 1
      // Predicated region
      $region13: #{conv_block_apply.1} parent=11 // pred_check
        %p178 = pneg %p72
      $region14: #{conv_block_apply.1} parent=11 // pred_check_branch
        %180 = sbr.rel (%p178) target = $region16
      $region15: #{conv_block_apply.1} parent=11 // pred_region
        _
      $region16: #{conv_block_apply.1} parent=11 // pred_fallthru
        _
      // Predicated region
      $region17: #{conv_block_apply.1} parent=11 // pred_check
        %p181 = pneg %p93
      $region18: #{conv_block_apply.1} parent=11 // pred_check_branch
        %183 = sbr.rel (%p181) target = $region20
      $region19: #{conv_block_apply.1} parent=11 // pred_region
        _
      $region20: #{conv_block_apply.1} parent=11 // pred_fallthru
        _
      // Predicated region
      $region21: #{conv_block_apply.1} parent=11 // pred_check
        %p184 = pneg %p114
      $region22: #{conv_block_apply.1} parent=11 // pred_check_branch
        %186 = sbr.rel (%p184) target = $region24
      $region23: #{conv_block_apply.1} parent=11 // pred_region
        _
      $region24: #{conv_block_apply.1} parent=11 // pred_fallthru
        _
      // Predicated region
      $region25: #{conv_block_apply.1} parent=11 // pred_check
        %p187 = pneg %p135
      $region26: #{conv_block_apply.1} parent=11 // pred_check_branch
        %189 = sbr.rel (%p187) target = $region28
      $region27: #{conv_block_apply.1} parent=11 // pred_region
        _
      $region28: #{conv_block_apply.1} parent=11 // pred_fallthru
        _
    $region12: #{conv_block_apply.1} parent=5 // pred_fallthru
      _
    %p190 = scmp.lt.s32.totalorder %s11, 4
    // Predicated region
    $region29: #{conv_block_apply.1} parent=5 // pred_check
      %p191 = pneg %p190
    $region30: #{conv_block_apply.1} parent=5 // pred_check_branch
      %193 = sbr.rel (%p191) target = $region32
    $region31: #{conv_block_apply.1} parent=5 // pred_region
      // Predicated region
      $region33: #{conv_block_apply.1} parent=31 // pred_check
        %p194 = pneg %p45
      $region34: #{conv_block_apply.1} parent=31 // pred_check_branch
        %196 = sbr.rel (%p194) target = $region36
      $region35: #{conv_block_apply.1} parent=31 // pred_region
        %p197 = scmp.lt.s32.totalorder %s18, 1
        %s198 = scalar_select %p197, %s18, 1
        %p199 = scmp.lt.s32.totalorder %s19, 1
        %s200 = scalar_select %p199, %s19, 1
        %s201 = smul.addr %s200, 3
        %s202 = smul.addr %s198, 6
        %s203 = sadd.s32 %s201, %s202
        %s204 = smul.addr %s203, 2
        %s205 = scalar_lea.vmem %s0, %s204
      $region36: #{conv_block_apply.1} parent=31 // pred_fallthru
        _
    $region32: #{conv_block_apply.1} parent=5 // pred_fallthru
      _
    %p206 = scmp.le.s32.totalorder 1, %s11
    %p207 = scmp.lt.s32.totalorder %s11, 5
    %p208 = pnand %p206, %p207
    %p209 = pneg %p208
    // Predicated region
    $region37: #{conv_block_apply.1} parent=5 // pred_check
      _
    $region38: #{conv_block_apply.1} parent=5 // pred_check_branch
      %211 = sbr.rel (%p208) target = $region40
    $region39: #{conv_block_apply.1} parent=5 // pred_region
      %s212 = ssub.s32 %s11, 1
      %p213 = scmp.lt.s32.totalorder %s20, 1
      %s214 = scalar_select %p213, %s20, 1
      %p215 = scmp.lt.s32.totalorder %s21, 1
      %s216 = scalar_select %p215, %s21, 1
      %s217 = smul.addr %s216, 3
      %s218 = smul.addr %s214, 6
      %s219 = sadd.s32 %s217, %s218
      %s220 = smul.addr %s219, 2
      %s221 = scalar_lea.vmem %s0, %s220
      %p222 = pneg %p51
      %p223 = pneg %p48
      %p224 = pneg %p72
      %p225 = pneg %p69
      %p226 = pneg %p93
      %p227 = pneg %p90
      %p228 = pneg %p114
      %p229 = pneg %p111
      %p230 = pneg %p135
      %p231 = pneg %p132
      %p232 = pneg %p163
      %p233 = pneg %p160
      %p234 = scmp.lt.s32.totalorder %s20, 1
      %s235 = scalar_select %p234, %s20, 1
      %p236 = scmp.lt.s32.totalorder %s21, 1
      %s237 = scalar_select %p236, %s21, 1
      %s238 = smul.addr %s237, 2
      %s239 = smul.addr %s235, 4
      %s240 = sadd.s32 %s238, %s239
      %s241 = smul.addr %s240, 8
      %s242 = scalar_lea.vmem %s5, %s241
      %p243 = scmp.lt.s32.totalorder %s20, 1
      %s244 = scalar_select %p243, %s20, 1
      %p245 = scmp.lt.s32.totalorder %s21, 1
      %s246 = scalar_select %p245, %s21, 1
      %s247 = smul.addr %s246, 3
      %s248 = smul.addr %s244, 6
      %s249 = sadd.s32 %s247, %s248
      %s250 = smul.addr %s249, 2
      %s251 = scalar_lea.vmem %s0, %s250
      %p252 = scmp.lt.s32.totalorder %s20, 1
      %s253 = scalar_select %p252, %s20, 1
      %p254 = scmp.lt.s32.totalorder %s21, 1
      %s255 = scalar_select %p254, %s21, 1
      %s256 = smul.addr %s255, 2
      %s257 = smul.addr %s253, 4
      %s258 = sadd.s32 %s256, %s257
      %s259 = smul.addr %s258, 8
      %s260 = scalar_lea.vmem %s5, %s259
      %v262 = vld [vmem:[%s251] sm:$0xf]
      %v265 = vunpack.c.l.s4 1983009808
      %v266 = vunpack.c.0.s8 %v265
      %v267 = vlaneseq
      %v268 = vshrl.u32 %v267, 7
      %v269 = vsub.s32 %v266, %v268
      %v270 = vrot.slane %v262, %v269
      %vm272 = vcmask 1041408
      %vm273 = vcmask 914436
      %vm274 = vmor %vm273, %vm272
      %275 = vst.msk [vmem:[#allocation2] sm:$0x33] %vm274, %v270
      %v276 = vld [vmem:[%s251] sm:$0xf]
      %v278 = vcombine.low %v276, %v276
      %v280 = vunpack.c.l.s4 1983009808
      %v281 = vunpack.c.0.s8 %v280
      %v282 = vlaneseq
      %v283 = vshrl.u32 %v282, 7
      %v284 = vsub.s32 %v281, %v283
      %v285 = vrot.slane %v278, %v284
      %286 = vrot.lane.b32.xlu0 %v285, 127
      %v287 = vpop.permute.xlu0 %286
      %v288 = vrot.slane %v287, 4
      %vm289 = vcmask 1039360
      %v290 = vsel %vm289, %v287, %v288
      %vm292 = vcmask 1043458
      %vm293 = vcmask 916486
      %vm294 = vmor %vm293, %vm292
      %295 = vst.msk [vmem:[#allocation2] sm:$0xcc] %vm294, %v290
      %v296 = vld [vmem:[%s251] sm:$0xf]
      %v299 = vunpack.c.l.s4 1983009808
      %v300 = vunpack.c.0.s8 %v299
      %v301 = vlaneseq
      %v302 = vshrl.u32 %v301, 7
      %v303 = vsub.s32 %v300, %v302
      %v304 = vrot.slane %v296, %v303
      %305 = vrot.lane.b32.xlu0 %v304, 126
      %v306 = vpop.permute.xlu0 %305
      %v307 = vrot.slane %v306, 4
      %vm308 = vcmask 1031168
      %v309 = vsel %vm308, %v306, %v307
      %311 = vst.msk [vmem:[#allocation2 + $0x8] sm:$0x33] %vm274, %v309
      %v312 = vld [vmem:[%s251] sm:$0x3f]
      %v314 = vcombine.low %v312, %v312
      %v316 = vunpack.c.l.s4 1983009808
      %v317 = vunpack.c.0.s8 %v316
      %v318 = vlaneseq
      %v319 = vshrl.u32 %v318, 7
      %v320 = vsub.s32 %v317, %v319
      %v321 = vrot.slane %v314, %v320
      %v323 = vunpack.c.l.s4 1983009808
      %v324 = vunpack.c.0.s8 %v323
      %v325 = vlaneseq
      %v326 = vshrl.u32 %v325, 7
      %v327 = vsub.s32 %v324, %v326
      %v328 = vrot.slane %v312, %v327
      %329 = vrot.lane.b32.xlu0 %v321, 104
      %v330 = vpop.permute.xlu0 %329
      %331 = vrot.lane.b32.xlu0 %v328, 104
      %v332 = vpop.permute.xlu0 %331
      %v333 = vrot.slane %v330, 4
      %v334 = vrot.slane %v332, 4
      %vm335 = vcmask 1043456
      %v336 = vsel %vm335, %v333, %v334
      %vm337 = vcmask 850944
      %v338 = vsel %vm337, %v330, %v336
      %340 = vst.msk [vmem:[#allocation2 + $0x8] sm:$0xcc] %vm294, %v338
      %v341 = vld [vmem:[%s251] sm:$0x3f]
      %v343 = vcombine.high %v341, %v341
      %v345 = vunpack.c.l.s4 1983009808
      %v346 = vunpack.c.0.s8 %v345
      %v347 = vlaneseq
      %v348 = vshrl.u32 %v347, 7
      %v349 = vsub.s32 %v346, %v348
      %v350 = vrot.slane %v341, %v349
      %v352 = vunpack.c.l.s4 1983009808
      %v353 = vunpack.c.0.s8 %v352
      %v354 = vlaneseq
      %v355 = vshrl.u32 %v354, 7
      %v356 = vsub.s32 %v353, %v355
      %v357 = vrot.slane %v343, %v356
      %358 = vrot.lane.b32.xlu0 %v350, 103
      %v359 = vpop.permute.xlu0 %358
      %360 = vrot.lane.b32.xlu0 %v357, 103
      %v361 = vpop.permute.xlu0 %360
      %v362 = vrot.slane %v359, 4
      %v363 = vrot.slane %v361, 4
      %v364 = vsel %vm335, %v362, %v363
      %vm365 = vcmask 842752
      %v366 = vsel %vm365, %v359, %v364
      %368 = vst.msk [vmem:[#allocation2 + $0x10] sm:$0x33] %vm274, %v366
      %v369 = vld [vmem:[%s251] sm:$0x3f]
      %v371 = vcombine.low %v369, %v369
      %v373 = vunpack.c.l.s4 1983009808
      %v374 = vunpack.c.0.s8 %v373
      %v375 = vlaneseq
      %v376 = vshrl.u32 %v375, 7
      %v377 = vsub.s32 %v374, %v376
      %v378 = vrot.slane %v371, %v377
      %v380 = vunpack.c.l.s4 1983009808
      %v381 = vunpack.c.0.s8 %v380
      %v382 = vlaneseq
      %v383 = vshrl.u32 %v382, 7
      %v384 = vsub.s32 %v381, %v383
      %v385 = vrot.slane %v369, %v384
      %386 = vrot.lane.b32.xlu0 %v378, 102
      %v387 = vpop.permute.xlu0 %386
      %388 = vrot.lane.b32.xlu0 %v385, 102
      %v389 = vpop.permute.xlu0 %388
      %v390 = vrot.slane %v387, 4
      %v391 = vrot.slane %v389, 4
      %v392 = vsel %vm335, %v390, %v391
      %vm393 = vcmask 834560
      %v394 = vsel %vm393, %v387, %v392
      %396 = vst.msk [vmem:[#allocation2 + $0x10] sm:$0xcc] %vm294, %v394
      %v397 = vld [vmem:[%s251] sm:$0x3f]
      %v399 = vcombine.high %v397, %v397
      %v401 = vunpack.c.l.s4 1983009808
      %v402 = vunpack.c.0.s8 %v401
      %v403 = vlaneseq
      %v404 = vshrl.u32 %v403, 7
      %v405 = vsub.s32 %v402, %v404
      %v406 = vrot.slane %v397, %v405
      %v408 = vunpack.c.l.s4 1983009808
      %v409 = vunpack.c.0.s8 %v408
      %v410 = vlaneseq
      %v411 = vshrl.u32 %v410, 7
      %v412 = vsub.s32 %v409, %v411
      %v413 = vrot.slane %v399, %v412
      %414 = vrot.lane.b32.xlu0 %v406, 80
      %v415 = vpop.permute.xlu0 %414
      %416 = vrot.lane.b32.xlu0 %v413, 80
      %v417 = vpop.permute.xlu0 %416
      %v418 = vrot.slane %v415, 4
      %v419 = vrot.slane %v417, 4
      %v420 = vsel %vm335, %v418, %v419
      %vm421 = vcmask 654336
      %v422 = vsel %vm421, %v415, %v420
      %424 = vst.msk [vmem:[#allocation2 + $0x18] sm:$0x33] %vm274, %v422
      %v425 = vld [vmem:[%s251] sm:$0x3f]
      %v427 = vcombine.low %v425, %v425
      %v429 = vunpack.c.l.s4 1983009808
      %v430 = vunpack.c.0.s8 %v429
      %v431 = vlaneseq
      %v432 = vshrl.u32 %v431, 7
      %v433 = vsub.s32 %v430, %v432
      %v434 = vrot.slane %v427, %v433
      %v436 = vunpack.c.l.s4 1983009808
      %v437 = vunpack.c.0.s8 %v436
      %v438 = vlaneseq
      %v439 = vshrl.u32 %v438, 7
      %v440 = vsub.s32 %v437, %v439
      %v441 = vrot.slane %v425, %v440
      %442 = vrot.lane.b32.xlu0 %v434, 79
      %v443 = vpop.permute.xlu0 %442
      %444 = vrot.lane.b32.xlu0 %v441, 79
      %v445 = vpop.permute.xlu0 %444
      %v446 = vrot.slane %v443, 4
      %v447 = vrot.slane %v445, 4
      %v448 = vsel %vm335, %v446, %v447
      %vm449 = vcmask 646144
      %v450 = vsel %vm449, %v443, %v448
      %452 = vst.msk [vmem:[#allocation2 + $0x18] sm:$0xcc] %vm294, %v450
      %v453 = vld [vmem:[%s251] sm:$0x3f]
      %v455 = vcombine.high %v453, %v453
      %v457 = vunpack.c.l.s4 1983009808
      %v458 = vunpack.c.0.s8 %v457
      %v459 = vlaneseq
      %v460 = vshrl.u32 %v459, 7
      %v461 = vsub.s32 %v458, %v460
      %v462 = vrot.slane %v453, %v461
      %v464 = vunpack.c.l.s4 1983009808
      %v465 = vunpack.c.0.s8 %v464
      %v466 = vlaneseq
      %v467 = vshrl.u32 %v466, 7
      %v468 = vsub.s32 %v465, %v467
      %v469 = vrot.slane %v455, %v468
      %470 = vrot.lane.b32.xlu0 %v462, 78
      %v471 = vpop.permute.xlu0 %470
      %472 = vrot.lane.b32.xlu0 %v469, 78
      %v473 = vpop.permute.xlu0 %472
      %v474 = vrot.slane %v471, 4
      %v475 = vrot.slane %v473, 4
      %v476 = vsel %vm335, %v474, %v475
      %vm477 = vcmask 637952
      %v478 = vsel %vm477, %v471, %v476
      %480 = vst.msk [vmem:[#allocation2 + $0x20] sm:$0x33] %vm274, %v478
      %v481 = vld [vmem:[%s1] sm:$0xf]
      %v482 = vld [vmem:[#allocation2] sm:$0xff]
      %v483 = vld [vmem:[#allocation2 + $0x8] sm:$0xff]
      %v484 = vld [vmem:[#allocation2 + $0x10] sm:$0xff]
      %v485 = vld [vmem:[#allocation2 + $0x18] sm:$0xff]
      %v486 = vld [vmem:[#allocation2 + $0x20] sm:$0x33]
      %v487 = vld [vmem:[%s2] sm:$0xff]
      %489 = vset.pattern.permute.xlu0 0
      %490 = vperm.xlu0 %489, %v487
      %v491 = vpop.permute.xlu0 %490
      %v498 = vunpack.c.l.b16 %v482
      %v499 = vunpack.c.h.b16 %v482
      %v500 = vunpack.c.l.b16 %v483
      %v501 = vunpack.c.h.b16 %v483
      %v502 = vunpack.c.l.b16 %v484
      %v503 = vunpack.c.h.b16 %v484
      %v504 = vunpack.c.l.b16 %v485
      %v505 = vunpack.c.h.b16 %v485
      %v506 = vunpack.c.l.b16 %v486
      %v507 = vunpack.c.h.b16 %v486
      %v508 = vpack.c.b16 %v500, %v498
      %v509 = vpack.c.b16 %v501, %v499
      %v510 = vpack.c.b16 %v504, %v502
      %v511 = vpack.c.b16 %v505, %v503
      %v512 = vpack.c.b16 %v506, %v506
      %v513 = vpack.c.b16 %v507, %v507
      %vm518 = vcmask 293888
      %v520 = vsel %vm518, %v481, 0
      %v523 = vsel %vm272, %v512, 0
      %v526 = vsel %vm272, %v513, 0
      %528 = vmatprep.subr.bf16.mxu0 %v509
      %529 = vmatpush1.bf16.msra.mxu0 %v508
      %530 = vmatprep.subr.bf16.mxu0 %v511
      %531 = vmatpush1.bf16.msra.mxu0 %v510
      %532 = vmatprep.subr.bf16.mxu0 %v526
      %533 = vmatpush1.bf16.msra.mxu0 %v523
      %534 = vmatprep.subr.bf16.mxu0 0
      %535 = vmatpush1.bf16.msra.mxu0 0
      %536 = vmatprep.subr.bf16.mxu0 0
      %537 = vmatpush1.bf16.msra.mxu0 0
      %538 = vmatprep.subr.bf16.mxu0 0
      %539 = vmatpush1.bf16.msra.mxu0 0
      %540 = vmatprep.subr.bf16.mxu0 0
      %541 = vmatpush1.bf16.msra.mxu0 0
      %542 = vmatprep.subr.bf16.mxu0 0
      %543 = vmatpush1.bf16.msra.mxu0 0
      %544 = vmatprep.subr.bf16.mxu0 0
      %545 = vmatpush1.bf16.msra.mxu0 0
      %546 = vmatprep.subr.bf16.mxu0 0
      %547 = vmatpush1.bf16.msra.mxu0 0
      %548 = vmatprep.subr.bf16.mxu0 0
      %549 = vmatpush1.bf16.msra.mxu0 0
      %550 = vmatprep.subr.bf16.mxu0 0
      %551 = vmatpush1.bf16.msra.mxu0 0
      %552 = vmatprep.subr.bf16.mxu0 0
      %553 = vmatpush1.bf16.msra.mxu0 0
      %554 = vmatprep.subr.bf16.mxu0 0
      %555 = vmatpush1.bf16.msra.mxu0 0
      %556 = vmatprep.subr.bf16.mxu0 0
      %557 = vmatpush1.bf16.msra.mxu0 0
      %558 = vmatprep.subr.bf16.mxu0 0
      %559 = vmatpush1.bf16.msra.mxu0 0
      %560 = vmatprep.mubr.bf16.mxu0 0
      %561 = vmatmul.mubr.bf16.gmra.mrb[0].mxu0 %v520
      %v562 = vpop.f32.mrb[0].mxu0
      %v563 = vadd.f32 %v491, %v562
      %v564 = vpop.f32.mrb[0].mxu0
      %v565 = vadd.f32 %v491, %v564
      %v566 = vpop.f32.mrb[0].mxu0
      %v567 = vpop.f32.mrb[0].mxu0
      %568 = vdwg.mxu0
      %v569 = vmax.f32 %v563, 0.0
      %v570 = vmax.f32 %v565, 0.0
      %v571 = vlaneseq
      %v572 = vand.u32 %v571, 127
      %v573 = vadd.s32 %v572, 128
      %v574 = vcvt.s32.f32 %v572
      %v575 = vcvt.s32.f32 %v573
      %v576 = vadd.f32 %v574, 0.5
      %v577 = vadd.f32 %v575, 0.5
      %v578 = vmul.f32 %v576, 0.041666668
      %v579 = vmul.f32 %v577, 0.041666668
      %v580 = vfloor.f32 %v578
      %v581 = vfloor.f32 %v579
      %v582 = vmul.f32 %v580, 24.0
      %v583 = vmul.f32 %v581, 24.0
      %v584 = vsub.f32 %v574, %v582
      %v585 = vsub.f32 %v575, %v583
      %s586 = smul.u32 %s21, 8
      %s587 = ssub.s32 %s586, 1
      %s588 = scvt.s32.f32 %s587
      %v589 = vstv %s588
      %v590 = vadd.f32 %v580, %v589
      %v591 = vadd.f32 %v581, %v589
      %vm592 = vcmp.lt.f32.partialorder %v584, 16.0
      %vm593 = vcmp.lt.f32.partialorder %v585, 16.0
      %vm594 = vcmp.ge.f32.partialorder %v590, 0.0
      %vm595 = vcmp.ge.f32.partialorder %v591, 0.0
      %vm596 = vmand %vm592, %vm594
      %vm597 = vmand %vm593, %vm595
      %vm598 = vcmp.lt.f32.partialorder %v590, 16.0
      %vm599 = vcmp.lt.f32.partialorder %v591, 16.0
      %vm600 = vmand %vm596, %vm598
      %vm601 = vmand %vm597, %vm599
      %v602 = vsel %vm600, 1, 0
      %v603 = vsel %vm601, 1, 0
      %vm604 = vcmp.eq.s32.totalorder %v602, 1
      %vm605 = vcmp.eq.s32.totalorder %v603, 1
      %v606 = vsel %vm604, %v569, 0.0
      %v607 = vsel %vm605, %v570, 0.0
      %v608 = vpack.c.bf16 %v606, %v606
      %v609 = vpack.c.bf16 %v607, %v607
      %v612 = vunpack.c.l.b16 %v608
      %v613 = vunpack.c.l.b16 %v609
      %v614 = vpack.c.b16 %v613, %v612
      %615 = vrot.lane.b32.xlu0 %v614, 1
      %v616 = vpop.permute.xlu0 %615
      %v617 = vrot.slane %v616, 4
      %vm618 = vcmask 7168
      %v619 = vsel %vm618, %v617, %v616
      %vm621 = vcmask 1043464
      %vm622 = vcmask 924676
      %vm623 = vmor %vm622, %vm621
      %624 = vst.msk [vmem:[#allocation3] sm:$0xff] %vm623, %v619
      %vm625 = vcmask 3072
      %626 = vst.msk [vmem:[#allocation3] sm:$0xf] %vm625, 0
      %vm627 = vcmask 1044360
      %vm628 = vcmask 64516
      %vm629 = vmor %vm628, %vm627
      %630 = vst.msk [vmem:[#allocation3 + $0x4] sm:$0xff] %vm629, 0
      %v631 = vld [vmem:[#allocation3] sm:$0xff]
      %vm632 = vcmask 1043456
      %vm633 = vcmask 523268
      %vm634 = vmor %vm633, %vm632
      %635 = vst.msk [vmem:[#allocation4] sm:$0xff] %vm634, %v631
      %v636 = vld [vmem:[#allocation3] sm:$0xff]
      %638 = vrot.lane.b32.xlu0 %v636, 127
      %v639 = vpop.permute.xlu0 %638
      %v640 = vrot.slane %v639, 4
      %v641 = vsel %vm289, %v639, %v640
      %643 = vst.msk [vmem:[#allocation4 + $0x8] sm:$0xff] %vm634, %v641
      %v644 = vld [vmem:[#allocation3] sm:$0xff]
      %646 = vrot.lane.b32.xlu0 %v644, 126
      %v647 = vpop.permute.xlu0 %646
      %v648 = vrot.slane %v647, 4
      %v649 = vsel %vm308, %v647, %v648
      %651 = vst.msk [vmem:[#allocation4 + $0x10] sm:$0xff] %vm634, %v649
      %v652 = vld [vmem:[#allocation3] sm:$0xff]
      %654 = vrot.lane.b32.xlu0 %v652, 104
      %v655 = vpop.permute.xlu0 %654
      %v656 = vrot.slane %v655, 4
      %v657 = vsel %vm337, %v655, %v656
      %659 = vst.msk [vmem:[#allocation4 + $0x18] sm:$0xff] %vm634, %v657
      %v660 = vld [vmem:[#allocation3] sm:$0xff]
      %662 = vrot.lane.b32.xlu0 %v660, 103
      %v663 = vpop.permute.xlu0 %662
      %v664 = vrot.slane %v663, 4
      %v665 = vsel %vm365, %v663, %v664
      %667 = vst.msk [vmem:[#allocation4 + $0x20] sm:$0xff] %vm634, %v665
      %v668 = vld [vmem:[#allocation3] sm:$0xff]
      %670 = vrot.lane.b32.xlu0 %v668, 102
      %v671 = vpop.permute.xlu0 %670
      %v672 = vrot.slane %v671, 4
      %v673 = vsel %vm393, %v671, %v672
      %675 = vst.msk [vmem:[#allocation4 + $0x28] sm:$0xff] %vm634, %v673
      %v676 = vld [vmem:[#allocation3] sm:$0xff]
      %678 = vrot.lane.b32.xlu0 %v676, 80
      %v679 = vpop.permute.xlu0 %678
      %v680 = vrot.slane %v679, 4
      %v681 = vsel %vm421, %v679, %v680
      %683 = vst.msk [vmem:[#allocation4 + $0x30] sm:$0xff] %vm634, %v681
      %v684 = vld [vmem:[#allocation3] sm:$0xff]
      %686 = vrot.lane.b32.xlu0 %v684, 79
      %v687 = vpop.permute.xlu0 %686
      %v688 = vrot.slane %v687, 4
      %v689 = vsel %vm449, %v687, %v688
      %691 = vst.msk [vmem:[#allocation4 + $0x38] sm:$0xff] %vm634, %v689
      %v692 = vld [vmem:[#allocation3] sm:$0xff]
      %694 = vrot.lane.b32.xlu0 %v692, 78
      %v695 = vpop.permute.xlu0 %694
      %v696 = vrot.slane %v695, 4
      %v697 = vsel %vm477, %v695, %v696
      %699 = vst.msk [vmem:[#allocation4 + $0x40] sm:$0xff] %vm634, %v697
      %v700 = vld [vmem:[%s3] sm:$0xf]
      %v701 = vld [vmem:[#allocation4] sm:$0xff]
      %v702 = vld [vmem:[#allocation4 + $0x8] sm:$0xff]
      %v703 = vld [vmem:[#allocation4 + $0x10] sm:$0xff]
      %v704 = vld [vmem:[#allocation4 + $0x18] sm:$0xff]
      %v705 = vld [vmem:[#allocation4 + $0x20] sm:$0xff]
      %v706 = vld [vmem:[#allocation4 + $0x28] sm:$0xff]
      %v707 = vld [vmem:[#allocation4 + $0x30] sm:$0xff]
      %v708 = vld [vmem:[#allocation4 + $0x38] sm:$0xff]
      %v709 = vld [vmem:[#allocation4 + $0x40] sm:$0xff]
      %v710 = vld [vmem:[%s4] sm:$0xff]
      %712 = vset.pattern.permute.xlu0 0
      %713 = vperm.xlu0 %712, %v710
      %v714 = vpop.permute.xlu0 %713
      %v725 = vunpack.c.l.b16 %v701
      %v726 = vunpack.c.h.b16 %v701
      %v727 = vunpack.c.l.b16 %v702
      %v728 = vunpack.c.h.b16 %v702
      %v729 = vunpack.c.l.b16 %v703
      %v730 = vunpack.c.h.b16 %v703
      %v731 = vunpack.c.l.b16 %v704
      %v732 = vunpack.c.h.b16 %v704
      %v733 = vunpack.c.l.b16 %v705
      %v734 = vunpack.c.h.b16 %v705
      %v735 = vunpack.c.l.b16 %v706
      %v736 = vunpack.c.h.b16 %v706
      %v737 = vunpack.c.l.b16 %v707
      %v738 = vunpack.c.h.b16 %v707
      %v739 = vunpack.c.l.b16 %v708
      %v740 = vunpack.c.h.b16 %v708
      %v741 = vunpack.c.l.b16 %v709
      %v742 = vunpack.c.h.b16 %v709
      %v743 = vpack.c.b16 %v727, %v725
      %v744 = vpack.c.b16 %v728, %v726
      %v745 = vpack.c.b16 %v731, %v729
      %v746 = vpack.c.b16 %v732, %v730
      %v747 = vpack.c.b16 %v735, %v733
      %v748 = vpack.c.b16 %v736, %v734
      %v749 = vpack.c.b16 %v739, %v737
      %v750 = vpack.c.b16 %v740, %v738
      %v751 = vpack.c.b16 %v741, %v741
      %v752 = vpack.c.b16 %v742, %v742
      %vm761 = vcmask 588800
      %v763 = vsel %vm761, %v700, 0
      %v766 = vsel %vm632, %v751, 0
      %v769 = vsel %vm632, %v752, 0
      %771 = vmatprep.subr.bf16.mxu0 %v744
      %772 = vmatpush1.bf16.msra.mxu0 %v743
      %773 = vmatprep.subr.bf16.mxu0 %v746
      %774 = vmatpush1.bf16.msra.mxu0 %v745
      %775 = vmatprep.subr.bf16.mxu0 %v748
      %776 = vmatpush1.bf16.msra.mxu0 %v747
      %777 = vmatprep.subr.bf16.mxu0 %v750
      %778 = vmatpush1.bf16.msra.mxu0 %v749
      %779 = vmatprep.subr.bf16.mxu0 %v769
      %780 = vmatpush1.bf16.msra.mxu0 %v766
      %781 = vmatprep.subr.bf16.mxu0 0
      %782 = vmatpush1.bf16.msra.mxu0 0
      %783 = vmatprep.subr.bf16.mxu0 0
      %784 = vmatpush1.bf16.msra.mxu0 0
      %785 = vmatprep.subr.bf16.mxu0 0
      %786 = vmatpush1.bf16.msra.mxu0 0
      %787 = vmatprep.subr.bf16.mxu0 0
      %788 = vmatpush1.bf16.msra.mxu0 0
      %789 = vmatprep.subr.bf16.mxu0 0
      %790 = vmatpush1.bf16.msra.mxu0 0
      %791 = vmatprep.subr.bf16.mxu0 0
      %792 = vmatpush1.bf16.msra.mxu0 0
      %793 = vmatprep.subr.bf16.mxu0 0
      %794 = vmatpush1.bf16.msra.mxu0 0
      %795 = vmatprep.subr.bf16.mxu0 0
      %796 = vmatpush1.bf16.msra.mxu0 0
      %797 = vmatprep.subr.bf16.mxu0 0
      %798 = vmatpush1.bf16.msra.mxu0 0
      %799 = vmatprep.subr.bf16.mxu0 0
      %800 = vmatpush1.bf16.msra.mxu0 0
      %801 = vmatprep.subr.bf16.mxu0 0
      %802 = vmatpush1.bf16.msra.mxu0 0
      %803 = vmatprep.mubr.bf16.mxu0 0
      %804 = vmatmul.mubr.bf16.gmra.mrb[0].mxu0 %v763
      %v805 = vpop.f32.mrb[0].mxu0
      %v806 = vadd.f32 %v714, %v805
      %v807 = vpop.f32.mrb[0].mxu0
      %v808 = vadd.f32 %v714, %v807
      %v809 = vpop.f32.mrb[0].mxu0
      %v810 = vpop.f32.mrb[0].mxu0
      %811 = vdwg.mxu0
      %v812 = vmax.f32 %v806, 0.0
      %v813 = vmax.f32 %v808, 0.0
      %814 = vst [vmem:[%s260] sm:$0xff] %v812
      %vm815 = vcmask 523264
      %816 = vst.msk [vmem:[%s260 + $0x8] sm:$0xff] %vm815, %v813
      %p817 = scmp.lt.s32.totalorder %s20, 1
      %s818 = scalar_select %p817, %s20, 1
      %p819 = scmp.lt.s32.totalorder %s21, 1
      %s820 = scalar_select %p819, %s21, 1
      %s821 = smul.addr %s820, 2
      %s822 = smul.addr %s818, 4
      %s823 = sadd.s32 %s821, %s822
      %s824 = smul.addr %s823, 8
      %s825 = scalar_lea.vmem %s5, %s824
      // Predicated region
      $region41: #{conv_block_apply.1} parent=39 // pred_check
        %p826 = pneg %p160
      $region42: #{conv_block_apply.1} parent=39 // pred_check_branch
        %828 = sbr.rel (%p826) target = $region44
      $region43: #{conv_block_apply.1} parent=39 // pred_region
        _
      $region44: #{conv_block_apply.1} parent=39 // pred_fallthru
        _
    $region40: #{conv_block_apply.1} parent=5 // pred_fallthru
      _
    %p829 = scmp.le.s32.totalorder 2, %s11
    // Predicated region
    $region45: #{conv_block_apply.1} parent=5 // pred_check
      %p830 = pneg %p829
    $region46: #{conv_block_apply.1} parent=5 // pred_check_branch
      %832 = sbr.rel (%p830) target = $region48
    $region47: #{conv_block_apply.1} parent=5 // pred_region
      %s833 = ssub.s32 %s11, 2
      // Predicated region
      $region49: #{conv_block_apply.1} parent=47 // pred_check
        %p834 = pneg %p166
      $region50: #{conv_block_apply.1} parent=47 // pred_check_branch
        %836 = sbr.rel (%p834) target = $region52
      $region51: #{conv_block_apply.1} parent=47 // pred_region
        %p837 = scmp.lt.s32.totalorder %s22, 1
        %s838 = scalar_select %p837, %s22, 1
        %p839 = scmp.lt.s32.totalorder %s23, 1
        %s840 = scalar_select %p839, %s23, 1
        %s841 = smul.addr %s840, 2
        %s842 = smul.addr %s838, 4
        %s843 = sadd.s32 %s841, %s842
        %s844 = smul.addr %s843, 8
        %s845 = scalar_lea.vmem %s5, %s844
      $region52: #{conv_block_apply.1} parent=47 // pred_fallthru
        _
    $region48: #{conv_block_apply.1} parent=5 // pred_fallthru
      _
  $region6: #{conv_block_apply.1} parent=0 // loop_footer
    %s15 = sadd.s32 1, %s11
  $region7: #{conv_block_apply.1} parent=0 // loop_footer_branch
    %10 = sbr.rel target = $region3
  $region8: #{conv_block_apply.1} parent=0 // loop_exit
    _

</llo_original>
